<compile_context>
chip_gen: v7x
topology: tpu7x:2x2x1
jax: 0.10.0
libtpu: 0.0.40
codegen_flags: <defaults>
</compile_context>

<pallas_src>
import functools

import jax
import jax.numpy as jnp
from jax.experimental import pallas as pl
from jax.experimental.pallas import tpu as pltpu


def _round_up(x, m):
    return ((x + m - 1) // m) * m


def _atten_frac_kernel(p_ref, blk_ref, w1_ref, b1_ref, w2_ref, b2_ref, o_ref):
    # Batch-on-sublanes: everything stays in the natural (batch, feature)
    # layout, so no transposes exist anywhere (wrapper or kernel).
    x = p_ref[...]                                                   # (TB, D_in)
    z1 = jnp.dot(x, w1_ref[...], preferred_element_type=jnp.float32) + b1_ref[...]
    h1 = jnp.tanh(z1)                                                # (TB, H1)
    z2 = jnp.dot(h1, w2_ref[...], preferred_element_type=jnp.float32) + b2_ref[...]
    # Sigmoid as a single EUP transcendental (no exp + reciprocal pair).
    h2 = 0.5 * jnp.tanh(0.5 * z2) + 0.5                              # (TB, H2)
    prod = h2 * blk_ref[...]                                         # (TB, H2)
    # Lane reduction over H2 (XLU slot; HBM/EUP are the binding units here).
    o_ref[...] = jnp.sum(prod, axis=1, keepdims=True)                # (TB, 1)


@functools.partial(jax.jit, static_argnames=("tile_b",))
def attenuation_fraction_sub(p_frac, block, w1, b1, w2, b2, *, tile_b=4096):
    """p_frac: (B, D_in), block: (B, H2); w1: (D_in, H1), w2: (H1, H2)."""
    B, D_in = p_frac.shape
    H1 = w1.shape[1]
    H2 = w2.shape[1]
    assert block.shape == (B, H2)

    # Batch tile lives on the sublane axis -> only needs to be a multiple of 8.
    # Clamp for small batches so we never allocate a huge mostly-padded block.
    tb = min(_round_up(tile_b, 8), _round_up(B, 8))
    n_tiles = pl.cdiv(B, tb)

    out = pl.pallas_call(
        _atten_frac_kernel,
        out_shape=jax.ShapeDtypeStruct((B, 1), jnp.float32),
        grid_spec=pltpu.PrefetchScalarGridSpec(
            num_scalar_prefetch=0,
            grid=(n_tiles,),
            in_specs=[
                pl.BlockSpec((tb, D_in), lambda i: (i, 0)),    # p_frac tile (streamed)
                pl.BlockSpec((tb, H2), lambda i: (i, 0)),      # block tile (dominant stream)
                pl.BlockSpec((D_in, H1), lambda i: (0, 0)),    # W1 (resident)
                pl.BlockSpec((1, H1), lambda i: (0, 0)),       # b1
                pl.BlockSpec((H1, H2), lambda i: (0, 0)),      # W2 (resident)
                pl.BlockSpec((1, H2), lambda i: (0, 0)),       # b2
            ],
            out_specs=pl.BlockSpec((tb, 1), lambda i: (i, 0)),
        ),
        compiler_params=pltpu.CompilerParams(
            dimension_semantics=("parallel",),
        ),
    )(p_frac, block, w1, b1.reshape(1, H1), w2, b2.reshape(1, H2))
    return out[:, 0]  # (B,)


def _reference(p_frac, block, w1, b1, w2, b2):
    h1 = jnp.tanh(p_frac @ w1 + b1)
    h2 = jax.nn.sigmoid(h1 @ w2 + b2)
    return jnp.sum(h2 * block, axis=-1)


if __name__ == "__main__":
    # Shapes consistent with the module: input_size=8, hidden_sizes=(32, 64),
    # activations=(Tanh, Sigmoid).  B=300 with tile_b=128 exercises the
    # multi-tile path plus the ragged (overhanging) last block; the default
    # tile_b exercises the clamped single-tile path.
    B, D_IN, H1, H2 = 300, 8, 32, 64

    key = jax.random.PRNGKey(0)
    k_p, k_blk, k_w1, k_b1, k_w2, k_b2 = jax.random.split(key, 6)

    p_frac = jax.random.normal(k_p, (B, D_IN), dtype=jnp.float32)
    block = jax.random.normal(k_blk, (B, H2), dtype=jnp.float32)

    # Deterministic synthetic parameters (PyTorch-Linear-like uniform init).
    lim1 = 1.0 / jnp.sqrt(D_IN)
    lim2 = 1.0 / jnp.sqrt(H1)
    w1 = jax.random.uniform(k_w1, (D_IN, H1), jnp.float32, -lim1, lim1)
    b1 = jax.random.uniform(k_b1, (H1,), jnp.float32, -lim1, lim1)
    w2 = jax.random.uniform(k_w2, (H1, H2), jnp.float32, -lim2, lim2)
    b2 = jax.random.uniform(k_b2, (H2,), jnp.float32, -lim2, lim2)

    out_multi = attenuation_fraction_sub(p_frac, block, w1, b1, w2, b2, tile_b=128)
    out_single = attenuation_fraction_sub(p_frac, block, w1, b1, w2, b2)  # default tile
    out_multi, out_single = jax.block_until_ready((out_multi, out_single))

    ref = _reference(p_frac, block, w1, b1, w2, b2)
    assert out_multi.shape == (B,)
    assert out_single.shape == (B,)
    assert jnp.allclose(out_multi, ref, atol=1e-4, rtol=1e-4), (out_multi, ref)
    assert jnp.allclose(out_single, ref, atol=1e-4, rtol=1e-4), (out_single, ref)

    print("KERNEL_OK")
</pallas_src>

<mosaic_0001>
module attributes {stable_mosaic.version = 11 : i64} {
  func.func @_atten_frac_kernel(%arg0: i32, %arg1: memref<128x8xf32, #tpu.memory_space<vmem>>, %arg2: memref<128x64xf32, #tpu.memory_space<vmem>>, %arg3: memref<8x32xf32, #tpu.memory_space<vmem>>, %arg4: memref<1x32xf32, #tpu.memory_space<vmem>>, %arg5: memref<32x64xf32, #tpu.memory_space<vmem>>, %arg6: memref<1x64xf32, #tpu.memory_space<vmem>>, %arg7: memref<128x1xf32, #tpu.memory_space<vmem>>) attributes {dimension_semantics = [#tpu.dimension_semantics<parallel>], iteration_bounds = array<i64: 3>, scalar_prefetch = 0 : i64, scratch_operands = 0 : i64, tpu.core_type = #tpu.core_type<tc>, window_params = [{transform_indices = @transform_0, window_bounds = array<i64: 128, 8>}, {transform_indices = @transform_1, window_bounds = array<i64: 128, 64>}, {pipeline_mode = #tpu.pipeline_mode<synchronous>, transform_indices = @transform_2, window_bounds = array<i64: 8, 32>}, {pipeline_mode = #tpu.pipeline_mode<synchronous>, transform_indices = @transform_3, window_bounds = array<i64: 1, 32>}, {pipeline_mode = #tpu.pipeline_mode<synchronous>, transform_indices = @transform_4, window_bounds = array<i64: 32, 64>}, {pipeline_mode = #tpu.pipeline_mode<synchronous>, transform_indices = @transform_5, window_bounds = array<i64: 1, 64>}, {transform_indices = @transform_6, window_bounds = array<i64: 128, 1>}]} {
    %c0 = arith.constant 0 : index
    %c0_0 = arith.constant 0 : index
    %0 = vector.load %arg1[%c0, %c0_0] : memref<128x8xf32, #tpu.memory_space<vmem>>, vector<128x8xf32>
    %c0_1 = arith.constant 0 : index
    %c0_2 = arith.constant 0 : index
    %1 = vector.load %arg3[%c0_1, %c0_2] : memref<8x32xf32, #tpu.memory_space<vmem>>, vector<8x32xf32>
    %cst = arith.constant dense<0.000000e+00> : vector<128x32xf32>
    %2 = tpu.matmul %0, %1, %cst {dimension_numbers = #tpu.dot_dimension_numbers<[1], [0], [0], [1], [0, 0, 1, 1], [], []>} : vector<128x8xf32>, vector<8x32xf32>, vector<128x32xf32> -> vector<128x32xf32>
    %c0_3 = arith.constant 0 : index
    %c0_4 = arith.constant 0 : index
    %3 = vector.load %arg4[%c0_3, %c0_4] : memref<1x32xf32, #tpu.memory_space<vmem>>, vector<1x32xf32>
    %4 = vector.broadcast %3 : vector<1x32xf32> to vector<128x32xf32>
    %5 = arith.addf %2, %4 : vector<128x32xf32>
    %6 = math.tanh %5 : vector<128x32xf32>
    %c0_5 = arith.constant 0 : index
    %c0_6 = arith.constant 0 : index
    %7 = vector.load %arg5[%c0_5, %c0_6] : memref<32x64xf32, #tpu.memory_space<vmem>>, vector<32x64xf32>
    %cst_7 = arith.constant dense<0.000000e+00> : vector<128x64xf32>
    %8 = tpu.matmul %6, %7, %cst_7 {dimension_numbers = #tpu.dot_dimension_numbers<[1], [0], [0], [1], [0, 0, 1, 1], [], []>} : vector<128x32xf32>, vector<32x64xf32>, vector<128x64xf32> -> vector<128x64xf32>
    %c0_8 = arith.constant 0 : index
    %c0_9 = arith.constant 0 : index
    %9 = vector.load %arg6[%c0_8, %c0_9] : memref<1x64xf32, #tpu.memory_space<vmem>>, vector<1x64xf32>
    %10 = vector.broadcast %9 : vector<1x64xf32> to vector<128x64xf32>
    %11 = arith.addf %8, %10 : vector<128x64xf32>
    %cst_10 = arith.constant 5.000000e-01 : f32
    %12 = vector.broadcast %cst_10 : f32 to vector<128x64xf32>
    %13 = arith.mulf %12, %11 : vector<128x64xf32>
    %14 = math.tanh %13 : vector<128x64xf32>
    %cst_11 = arith.constant 5.000000e-01 : f32
    %15 = vector.broadcast %cst_11 : f32 to vector<128x64xf32>
    %16 = arith.mulf %15, %14 : vector<128x64xf32>
    %cst_12 = arith.constant 5.000000e-01 : f32
    %17 = vector.broadcast %cst_12 : f32 to vector<128x64xf32>
    %18 = arith.addf %16, %17 : vector<128x64xf32>
    %c0_13 = arith.constant 0 : index
    %c0_14 = arith.constant 0 : index
    %19 = vector.load %arg2[%c0_13, %c0_14] : memref<128x64xf32, #tpu.memory_space<vmem>>, vector<128x64xf32>
    %20 = arith.mulf %18, %19 : vector<128x64xf32>
    %cst_15 = arith.constant dense<0.000000e+00> : vector<128xf32>
    %21 = vector.multi_reduction <add>, %20, %cst_15 [1] : vector<128x64xf32> to vector<128xf32>
    %22 = vector.shape_cast %21 : vector<128xf32> to vector<128x1xf32>
    %c0_16 = arith.constant 0 : index
    %c0_17 = arith.constant 0 : index
    %23 = vector.load %arg7[%c0_16, %c0_17] : memref<128x1xf32, #tpu.memory_space<vmem>>, vector<128x1xf32>
    tpu.vector_store %arg7[%c0_16, %c0_17], %22 {strides = array<i32>} : memref<128x1xf32, #tpu.memory_space<vmem>>, vector<128x1xf32>,
    return
  }
  func.func @transform_0(%arg0: i32) -> (i32, i32) {
    %c0_i32 = arith.constant 0 : i32
    %c0_i32_0 = arith.constant 0 : i32
    return %arg0, %c0_i32 : i32, i32
  }
  func.func @transform_1(%arg0: i32) -> (i32, i32) {
    %c0_i32 = arith.constant 0 : i32
    %c0_i32_0 = arith.constant 0 : i32
    return %arg0, %c0_i32 : i32, i32
  }
  func.func @transform_2(%arg0: i32) -> (i32, i32) {
    %c0_i32 = arith.constant 0 : i32
    %c0_i32_0 = arith.constant 0 : i32
    %c0_i32_1 = arith.constant 0 : i32
    return %c0_i32, %c0_i32_0 : i32, i32
  }
  func.func @transform_3(%arg0: i32) -> (i32, i32) {
    %c0_i32 = arith.constant 0 : i32
    %c0_i32_0 = arith.constant 0 : i32
    %c0_i32_1 = arith.constant 0 : i32
    return %c0_i32, %c0_i32_0 : i32, i32
  }
  func.func @transform_4(%arg0: i32) -> (i32, i32) {
    %c0_i32 = arith.constant 0 : i32
    %c0_i32_0 = arith.constant 0 : i32
    %c0_i32_1 = arith.constant 0 : i32
    return %c0_i32, %c0_i32_0 : i32, i32
  }
  func.func @transform_5(%arg0: i32) -> (i32, i32) {
    %c0_i32 = arith.constant 0 : i32
    %c0_i32_0 = arith.constant 0 : i32
    %c0_i32_1 = arith.constant 0 : i32
    return %c0_i32, %c0_i32_0 : i32, i32
  }
  func.func @transform_6(%arg0: i32) -> (i32, i32) {
    %c0_i32 = arith.constant 0 : i32
    %c0_i32_0 = arith.constant 0 : i32
    return %arg0, %c0_i32 : i32, i32
  }
}

</mosaic_0001>

<llo_original>
// kernel: attenuation_fraction_sub.1
$region0: #{attenuation_fraction_sub.1}
  #allocation0 [shape = 'u32[]', space=smem, size = 0x4, offset = 0x4, fixed_abs, tag = 'smem constant byte address 0x4 - core index']
  #allocation1 [shape = 'u32[144,128]{1,0:T(1,128)}', space=vmem, size = 0x12000, scoped, tag = 'internal scratch']
  %s0 = inlined_call_operand.vmem [shape: f32[300,8], index: 0, kind: input, shape index: {}]
  %s1 = inlined_call_operand.vmem [shape: f32[300,64], index: 1, kind: input, shape index: {}]
  %s2 = inlined_call_operand.vmem [shape: f32[8,32], index: 2, kind: input, shape index: {}]
  %s3 = inlined_call_operand.vmem [shape: f32[1,32], index: 3, kind: input, shape index: {}]
  %s4 = inlined_call_operand.vmem [shape: f32[32,64], index: 4, kind: input, shape index: {}]
  %s5 = inlined_call_operand.vmem [shape: f32[1,64], index: 5, kind: input, shape index: {}]
  %s6 = inlined_call_operand.vmem [shape: f32[300,1], index: 6, kind: output, shape index: {}]
  %s7 = sld [smem:[#allocation0]]
  $region105: #{attenuation_fraction_sub.1} parent=0
    _
  %s9 = ssub.s32 1, %s7
  %s10 = scalar_select 0, %s9, %s7
  $region1: #{attenuation_fraction_sub.1} parent=0
    #allocation2 [shape = 'u8[131072]{0}', space=vmem, size = 0x20000, scoped, tag = 'output window, operand 0']
    loop: start=0, step=1, limit=5
    $region2: #{attenuation_fraction_sub.1} parent=1 // loop_pre_header
      _
    $region3: #{attenuation_fraction_sub.1} parent=1 // loop_header
      %s12 = sphi 0, %s16
      %p13 = scmp.ge.s32.totalorder %s12, 5
      %s22 = sphi 0, %s24
      %s25 = sphi 0, %s22
      %s26 = sphi 0, %s25
      %s42 = sphi 0, %s26
      %s48 = sphi 0, %s50
      %s51 = sphi 0, %s48
      %s52 = sphi 0, %s51
      %s68 = sphi 0, %s52
      %s72 = sphi 0, %s72
      %s74 = sphi 0, %s72
      %s75 = sphi 0, %s74
      %s89 = sphi 0, %s75
      %s93 = sphi 0, %s93
      %s95 = sphi 0, %s93
      %s96 = sphi 0, %s95
      %s110 = sphi 0, %s96
      %s114 = sphi 0, %s114
      %s116 = sphi 0, %s114
      %s117 = sphi 0, %s116
      %s131 = sphi 0, %s117
      %s135 = sphi 0, %s135
      %s137 = sphi 0, %s135
      %s138 = sphi 0, %s137
      %s152 = sphi 0, %s138
      %s158 = sphi 0, %s160
      %s161 = sphi 0, %s158
      %s162 = sphi 0, %s161
      %s178 = sphi 0, %s162
    $region4: #{attenuation_fraction_sub.1} parent=1 // loop_header_branch
      %15 = sbr.rel (%p13) target = $region8
    $region5: #{attenuation_fraction_sub.1} parent=1 // loop_body
      %s17 = ssub.s32 %s12, 1
      %s18 = ssub.s32 %s12, 2
      %s19 = sadd.s32 %s12, 1
      %s20 = ssub.s32 %s12, %s19
      %p21 = scmp.eq.s32.totalorder %s20, 0
      %s23 = sadd.s32 %s22, 1
      %s24 = scalar_select %p21, %s22, %s23
      %p27 = pneg %p21
      %p28 = scmp.eq.s32.totalorder %s12, 2
      %p29 = por %p27, %p28
      %p30 = scmp.ne.s32.totalorder %s22, %s25
      %p31 = scmp.eq.s32.totalorder %s12, 0
      %p32 = por %p30, %p31
      %p33 = scmp.ne.s32.totalorder %s22, %s25
      %p34 = scmp.eq.s32.totalorder %s17, 2
      %p35 = por %p33, %p34
      %p36 = scmp.ne.s32.totalorder %s25, %s26
      %p37 = scmp.eq.s32.totalorder %s17, 0
      %p38 = por %p36, %p37
      %p39 = scmp.ne.s32.totalorder %s25, %s26
      %p40 = scmp.eq.s32.totalorder %s18, 2
      %p41 = por %p39, %p40
      %p43 = scmp.ne.s32.totalorder %s26, %s42
      %p44 = scmp.eq.s32.totalorder %s18, 0
      %p45 = por %p43, %p44
      %s46 = ssub.s32 %s12, %s19
      %p47 = scmp.eq.s32.totalorder %s46, 0
      %s49 = sadd.s32 %s48, 1
      %s50 = scalar_select %p47, %s48, %s49
      %p53 = pneg %p47
      %p54 = scmp.eq.s32.totalorder %s12, 2
      %p55 = por %p53, %p54
      %p56 = scmp.ne.s32.totalorder %s48, %s51
      %p57 = scmp.eq.s32.totalorder %s12, 0
      %p58 = por %p56, %p57
      %p59 = scmp.ne.s32.totalorder %s48, %s51
      %p60 = scmp.eq.s32.totalorder %s17, 2
      %p61 = por %p59, %p60
      %p62 = scmp.ne.s32.totalorder %s51, %s52
      %p63 = scmp.eq.s32.totalorder %s17, 0
      %p64 = por %p62, %p63
      %p65 = scmp.ne.s32.totalorder %s51, %s52
      %p66 = scmp.eq.s32.totalorder %s18, 2
      %p67 = por %p65, %p66
      %p69 = scmp.ne.s32.totalorder %s52, %s68
      %p70 = scmp.eq.s32.totalorder %s18, 0
      %p71 = por %p69, %p70
      %s73 = sadd.s32 %s72, 1
      %p76 = scmp.eq.s32.totalorder %s12, 2
      %p77 = scmp.ne.s32.totalorder %s72, %s74
      %p78 = scmp.eq.s32.totalorder %s12, 0
      %p79 = por %p77, %p78
      %p80 = scmp.ne.s32.totalorder %s72, %s74
      %p81 = scmp.eq.s32.totalorder %s17, 2
      %p82 = por %p80, %p81
      %p83 = scmp.ne.s32.totalorder %s74, %s75
      %p84 = scmp.eq.s32.totalorder %s17, 0
      %p85 = por %p83, %p84
      %p86 = scmp.ne.s32.totalorder %s74, %s75
      %p87 = scmp.eq.s32.totalorder %s18, 2
      %p88 = por %p86, %p87
      %p90 = scmp.ne.s32.totalorder %s75, %s89
      %p91 = scmp.eq.s32.totalorder %s18, 0
      %p92 = por %p90, %p91
      %s94 = sadd.s32 %s93, 1
      %p97 = scmp.eq.s32.totalorder %s12, 2
      %p98 = scmp.ne.s32.totalorder %s93, %s95
      %p99 = scmp.eq.s32.totalorder %s12, 0
      %p100 = por %p98, %p99
      %p101 = scmp.ne.s32.totalorder %s93, %s95
      %p102 = scmp.eq.s32.totalorder %s17, 2
      %p103 = por %p101, %p102
      %p104 = scmp.ne.s32.totalorder %s95, %s96
      %p105 = scmp.eq.s32.totalorder %s17, 0
      %p106 = por %p104, %p105
      %p107 = scmp.ne.s32.totalorder %s95, %s96
      %p108 = scmp.eq.s32.totalorder %s18, 2
      %p109 = por %p107, %p108
      %p111 = scmp.ne.s32.totalorder %s96, %s110
      %p112 = scmp.eq.s32.totalorder %s18, 0
      %p113 = por %p111, %p112
      %s115 = sadd.s32 %s114, 1
      %p118 = scmp.eq.s32.totalorder %s12, 2
      %p119 = scmp.ne.s32.totalorder %s114, %s116
      %p120 = scmp.eq.s32.totalorder %s12, 0
      %p121 = por %p119, %p120
      %p122 = scmp.ne.s32.totalorder %s114, %s116
      %p123 = scmp.eq.s32.totalorder %s17, 2
      %p124 = por %p122, %p123
      %p125 = scmp.ne.s32.totalorder %s116, %s117
      %p126 = scmp.eq.s32.totalorder %s17, 0
      %p127 = por %p125, %p126
      %p128 = scmp.ne.s32.totalorder %s116, %s117
      %p129 = scmp.eq.s32.totalorder %s18, 2
      %p130 = por %p128, %p129
      %p132 = scmp.ne.s32.totalorder %s117, %s131
      %p133 = scmp.eq.s32.totalorder %s18, 0
      %p134 = por %p132, %p133
      %s136 = sadd.s32 %s135, 1
      %p139 = scmp.eq.s32.totalorder %s12, 2
      %p140 = scmp.ne.s32.totalorder %s135, %s137
      %p141 = scmp.eq.s32.totalorder %s12, 0
      %p142 = por %p140, %p141
      %p143 = scmp.ne.s32.totalorder %s135, %s137
      %p144 = scmp.eq.s32.totalorder %s17, 2
      %p145 = por %p143, %p144
      %p146 = scmp.ne.s32.totalorder %s137, %s138
      %p147 = scmp.eq.s32.totalorder %s17, 0
      %p148 = por %p146, %p147
      %p149 = scmp.ne.s32.totalorder %s137, %s138
      %p150 = scmp.eq.s32.totalorder %s18, 2
      %p151 = por %p149, %p150
      %p153 = scmp.ne.s32.totalorder %s138, %s152
      %p154 = scmp.eq.s32.totalorder %s18, 0
      %p155 = por %p153, %p154
      %s156 = ssub.s32 %s12, %s19
      %p157 = scmp.eq.s32.totalorder %s156, 0
      %s159 = sadd.s32 %s158, 1
      %s160 = scalar_select %p157, %s158, %s159
      %p163 = pneg %p157
      %p164 = scmp.eq.s32.totalorder %s12, 2
      %p165 = por %p163, %p164
      %p166 = scmp.ne.s32.totalorder %s158, %s161
      %p167 = scmp.eq.s32.totalorder %s12, 0
      %p168 = por %p166, %p167
      %p169 = scmp.ne.s32.totalorder %s158, %s161
      %p170 = scmp.eq.s32.totalorder %s17, 2
      %p171 = por %p169, %p170
      %p172 = scmp.ne.s32.totalorder %s161, %s162
      %p173 = scmp.eq.s32.totalorder %s17, 0
      %p174 = por %p172, %p173
      %p175 = scmp.ne.s32.totalorder %s161, %s162
      %p176 = scmp.eq.s32.totalorder %s18, 2
      %p177 = por %p175, %p176
      %p179 = scmp.ne.s32.totalorder %s162, %s178
      %p180 = scmp.eq.s32.totalorder %s18, 0
      %p181 = por %p179, %p180
      %p182 = scmp.le.s32.totalorder 1, %s12
      %p183 = scmp.lt.s32.totalorder %s12, 4
      %p184 = pnand %p182, %p183
      %p185 = pneg %p184
      // Predicated region
      $region9: #{attenuation_fraction_sub.1} parent=5 // pred_check
        _
      $region10: #{attenuation_fraction_sub.1} parent=5 // pred_check_branch
        %187 = sbr.rel (%p184) target = $region12
      $region11: #{attenuation_fraction_sub.1} parent=5 // pred_region
        %s188 = ssub.s32 %s12, 1
        // Predicated region
        $region13: #{attenuation_fraction_sub.1} parent=11 // pred_check
          %p189 = pneg %p85
        $region14: #{attenuation_fraction_sub.1} parent=11 // pred_check_branch
          %191 = sbr.rel (%p189) target = $region16
        $region15: #{attenuation_fraction_sub.1} parent=11 // pred_region
          _
        $region16: #{attenuation_fraction_sub.1} parent=11 // pred_fallthru
          _
        // Predicated region
        $region17: #{attenuation_fraction_sub.1} parent=11 // pred_check
          %p192 = pneg %p106
        $region18: #{attenuation_fraction_sub.1} parent=11 // pred_check_branch
          %194 = sbr.rel (%p192) target = $region20
        $region19: #{attenuation_fraction_sub.1} parent=11 // pred_region
          _
        $region20: #{attenuation_fraction_sub.1} parent=11 // pred_fallthru
          _
        // Predicated region
        $region21: #{attenuation_fraction_sub.1} parent=11 // pred_check
          %p195 = pneg %p127
        $region22: #{attenuation_fraction_sub.1} parent=11 // pred_check_branch
          %197 = sbr.rel (%p195) target = $region24
        $region23: #{attenuation_fraction_sub.1} parent=11 // pred_region
          _
        $region24: #{attenuation_fraction_sub.1} parent=11 // pred_fallthru
          _
        // Predicated region
        $region25: #{attenuation_fraction_sub.1} parent=11 // pred_check
          %p198 = pneg %p148
        $region26: #{attenuation_fraction_sub.1} parent=11 // pred_check_branch
          %200 = sbr.rel (%p198) target = $region28
        $region27: #{attenuation_fraction_sub.1} parent=11 // pred_region
          _
        $region28: #{attenuation_fraction_sub.1} parent=11 // pred_fallthru
          _
      $region12: #{attenuation_fraction_sub.1} parent=5 // pred_fallthru
        _
      %p201 = scmp.lt.s32.totalorder %s12, 3
      // Predicated region
      $region29: #{attenuation_fraction_sub.1} parent=5 // pred_check
        %p202 = pneg %p201
      $region30: #{attenuation_fraction_sub.1} parent=5 // pred_check_branch
        %204 = sbr.rel (%p202) target = $region32
      $region31: #{attenuation_fraction_sub.1} parent=5 // pred_region
        // Predicated region
        $region33: #{attenuation_fraction_sub.1} parent=31 // pred_check
          %p205 = pneg %p32
        $region34: #{attenuation_fraction_sub.1} parent=31 // pred_check_branch
          %207 = sbr.rel (%p205) target = $region36
        $region35: #{attenuation_fraction_sub.1} parent=31 // pred_region
          %s208 = smul.u32 16, %s12
          %s209 = ssub.s32 38, %s208
          %p210 = scmp.lt.s32.totalorder %s209, 16
          %s211 = scalar_select %p210, %s209, 16
          %s212 = smul.u32 128, %s211
          %p213 = scmp.lt.s32.totalorder %s208, 37
          %s214 = scalar_select %p213, %s208, 37
          %s215 = smul.addr %s214, 8
          %s216 = scalar_lea.vmem %s0, %s215
          %s217 = smul.u32 16, %s12
          %s218 = ssub.s32 38, %s217
          %p219 = scmp.lt.s32.totalorder %s218, 16
          %s220 = scalar_select %p219, %s218, 16
          %s221 = smul.u32 128, %s220
        $region36: #{attenuation_fraction_sub.1} parent=31 // pred_fallthru
          _
        // Predicated region
        $region37: #{attenuation_fraction_sub.1} parent=31 // pred_check
          %p222 = pneg %p58
        $region38: #{attenuation_fraction_sub.1} parent=31 // pred_check_branch
          %224 = sbr.rel (%p222) target = $region40
        $region39: #{attenuation_fraction_sub.1} parent=31 // pred_region
          %s225 = smul.u32 16, %s12
          %s226 = ssub.s32 38, %s225
          %p227 = scmp.lt.s32.totalorder %s226, 16
          %s228 = scalar_select %p227, %s226, 16
          %s229 = smul.u32 128, %s228
          %p230 = scmp.lt.s32.totalorder %s225, 37
          %s231 = scalar_select %p230, %s225, 37
          %s232 = smul.addr %s231, 8
          %s233 = scalar_lea.vmem %s1, %s232
          %s234 = smul.u32 16, %s12
          %s235 = ssub.s32 38, %s234
          %p236 = scmp.lt.s32.totalorder %s235, 16
          %s237 = scalar_select %p236, %s235, 16
          %s238 = smul.u32 128, %s237
        $region40: #{attenuation_fraction_sub.1} parent=31 // pred_fallthru
          _
      $region32: #{attenuation_fraction_sub.1} parent=5 // pred_fallthru
        _
      %p239 = scmp.le.s32.totalorder 1, %s12
      %p240 = scmp.lt.s32.totalorder %s12, 4
      %p241 = pnand %p239, %p240
      %p242 = pneg %p241
      // Predicated region
      $region41: #{attenuation_fraction_sub.1} parent=5 // pred_check
        _
      $region42: #{attenuation_fraction_sub.1} parent=5 // pred_check_branch
        %244 = sbr.rel (%p241) target = $region44
      $region43: #{attenuation_fraction_sub.1} parent=5 // pred_region
        %s245 = ssub.s32 %s12, 1
        %s246 = smul.u32 16, %s17
        %s247 = ssub.s32 38, %s246
        %p248 = scmp.lt.s32.totalorder %s247, 16
        %s249 = scalar_select %p248, %s247, 16
        %s250 = smul.u32 128, %s249
        %p251 = scmp.lt.s32.totalorder %s246, 37
        %s252 = scalar_select %p251, %s246, 37
        %s253 = smul.addr %s252, 8
        %s254 = scalar_lea.vmem %s0, %s253
        %p255 = pneg %p38
        %p256 = pneg %p35
        %s257 = smul.u32 16, %s17
        %s258 = ssub.s32 38, %s257
        %p259 = scmp.lt.s32.totalorder %s258, 16
        %s260 = scalar_select %p259, %s258, 16
        %s261 = smul.u32 128, %s260
        %p262 = scmp.lt.s32.totalorder %s257, 37
        %s263 = scalar_select %p262, %s257, 37
        %s264 = smul.addr %s263, 8
        %s265 = scalar_lea.vmem %s1, %s264
        %p266 = pneg %p64
        %p267 = pneg %p61
        %p268 = pneg %p85
        %p269 = pneg %p82
        %p270 = pneg %p106
        %p271 = pneg %p103
        %p272 = pneg %p127
        %p273 = pneg %p124
        %p274 = pneg %p148
        %p275 = pneg %p145
        %p276 = pneg %p174
        %p277 = pneg %p171
        %s278 = sand.u32 %s161, 1
        %s279 = sand.u32 %s161, 1
        %s280 = smul.addr %s279, 128
        %s281 = scalar_lea.vmem [#allocation2], %s280
        %s282 = smul.u32 16, %s17
        %s283 = ssub.s32 38, %s282
        %p284 = scmp.lt.s32.totalorder %s283, 16
        %s285 = scalar_select %p284, %s283, 16
        %s286 = smul.u32 128, %s285
        %p287 = scmp.lt.s32.totalorder %s282, 37
        %s288 = scalar_select %p287, %s282, 37
        %s289 = smul.addr %s288, 8
        %s290 = scalar_lea.vmem %s0, %s289
        %s291 = smul.u32 16, %s17
        %s292 = ssub.s32 38, %s291
        %p293 = scmp.lt.s32.totalorder %s292, 16
        %s294 = scalar_select %p293, %s292, 16
        %s295 = smul.u32 128, %s294
        %s296 = smul.u32 16, %s17
        %s297 = ssub.s32 38, %s296
        %p298 = scmp.lt.s32.totalorder %s297, 16
        %s299 = scalar_select %p298, %s297, 16
        %s300 = smul.u32 128, %s299
        %p301 = scmp.lt.s32.totalorder %s296, 37
        %s302 = scalar_select %p301, %s296, 37
        %s303 = smul.addr %s302, 8
        %s304 = scalar_lea.vmem %s1, %s303
        %s305 = smul.u32 16, %s17
        %s306 = ssub.s32 38, %s305
        %p307 = scmp.lt.s32.totalorder %s306, 16
        %s308 = scalar_select %p307, %s306, 16
        %s309 = smul.u32 128, %s308
        %s310 = smul.u32 16, %s17
        %s311 = ssub.s32 38, %s310
        %p312 = scmp.lt.s32.totalorder %s311, 16
        %s313 = scalar_select %p312, %s311, 16
        %s314 = smul.u32 128, %s313
        %v315 = vld [vmem:[%s290] sm:$0xff]
        %v316 = vld [vmem:[%s290 + $0x8] sm:$0xff]
        %v317 = vld [vmem:[%s290 + $0x10] sm:$0xff]
        %v318 = vld [vmem:[%s290 + $0x18] sm:$0xff]
        %v319 = vld [vmem:[%s290 + $0x20] sm:$0xff]
        %v320 = vld [vmem:[%s290 + $0x28] sm:$0xff]
        %v321 = vld [vmem:[%s290 + $0x30] sm:$0xff]
        %v322 = vld [vmem:[%s290 + $0x38] sm:$0xff]
        %v323 = vld [vmem:[%s290 + $0x40] sm:$0xff]
        %v324 = vld [vmem:[%s290 + $0x48] sm:$0xff]
        %v325 = vld [vmem:[%s290 + $0x50] sm:$0xff]
        %v326 = vld [vmem:[%s290 + $0x58] sm:$0xff]
        %v327 = vld [vmem:[%s290 + $0x60] sm:$0xff]
        %v328 = vld [vmem:[%s290 + $0x68] sm:$0xff]
        %v329 = vld [vmem:[%s290 + $0x70] sm:$0xff]
        %v330 = vld [vmem:[%s290 + $0x78] sm:$0xff]
        %v331 = vld [vmem:[%s2] sm:$0xff]
        %v332 = vld [vmem:[%s3] sm:$0x1]
        %v334 = vlaneseq
        %v335 = vshrl.u32 %v334, 7
        %v336 = vsub.s32 0, %v335
        %v337 = vrot.slane %v332, %v336
        %vm339 = vcmask 64512
        %v341 = vsel %vm339, %v315, 0
        %v344 = vsel %vm339, %v316, 0
        %v347 = vsel %vm339, %v317, 0
        %v350 = vsel %vm339, %v318, 0
        %v353 = vsel %vm339, %v319, 0
        %v356 = vsel %vm339, %v320, 0
        %v359 = vsel %vm339, %v321, 0
        %v362 = vsel %vm339, %v322, 0
        %v365 = vsel %vm339, %v323, 0
        %v368 = vsel %vm339, %v324, 0
        %v371 = vsel %vm339, %v325, 0
        %v374 = vsel %vm339, %v326, 0
        %v377 = vsel %vm339, %v327, 0
        %v380 = vsel %vm339, %v328, 0
        %v383 = vsel %vm339, %v329, 0
        %v386 = vsel %vm339, %v330, 0
        %388 = vmatprep.subr.mxu0 0.0
        %389 = vmatpush1.msra.mxu0 %v331
        %390 = vmatprep.subr.mxu0 0.0
        %391 = vmatpush1.msra.mxu0 0.0
        %392 = vmatprep.subr.mxu0 0.0
        %393 = vmatpush1.msra.mxu0 0.0
        %394 = vmatprep.subr.mxu0 0.0
        %395 = vmatpush1.msra.mxu0 0.0
        %396 = vmatprep.subr.mxu0 0.0
        %397 = vmatpush1.msra.mxu0 0.0
        %398 = vmatprep.subr.mxu0 0.0
        %399 = vmatpush1.msra.mxu0 0.0
        %400 = vmatprep.subr.mxu0 0.0
        %401 = vmatpush1.msra.mxu0 0.0
        %402 = vmatprep.subr.mxu0 0.0
        %403 = vmatpush1.msra.mxu0 0.0
        %404 = vmatprep.subr.mxu0 0.0
        %405 = vmatpush1.msra.mxu0 0.0
        %406 = vmatprep.subr.mxu0 0.0
        %407 = vmatpush1.msra.mxu0 0.0
        %408 = vmatprep.subr.mxu0 0.0
        %409 = vmatpush1.msra.mxu0 0.0
        %410 = vmatprep.subr.mxu0 0.0
        %411 = vmatpush1.msra.mxu0 0.0
        %412 = vmatprep.subr.mxu0 0.0
        %413 = vmatpush1.msra.mxu0 0.0
        %414 = vmatprep.subr.mxu0 0.0
        %415 = vmatpush1.msra.mxu0 0.0
        %416 = vmatprep.subr.mxu0 0.0
        %417 = vmatpush1.msra.mxu0 0.0
        %418 = vmatprep.subr.mxu0 0.0
        %419 = vmatpush1.msra.mxu0 0.0
        %420 = vmatprep.subr.mxu0 0.0
        %421 = vmatpush1.msra.mxu0 0.0
        %422 = vmatprep.subr.mxu0 0.0
        %423 = vmatpush1.msra.mxu0 0.0
        %424 = vmatprep.subr.mxu0 0.0
        %425 = vmatpush1.msra.mxu0 0.0
        %426 = vmatprep.subr.mxu0 0.0
        %427 = vmatpush1.msra.mxu0 0.0
        %428 = vmatprep.subr.mxu0 0.0
        %429 = vmatpush1.msra.mxu0 0.0
        %430 = vmatprep.subr.mxu0 0.0
        %431 = vmatpush1.msra.mxu0 0.0
        %432 = vmatprep.subr.mxu0 0.0
        %433 = vmatpush1.msra.mxu0 0.0
        %434 = vmatprep.subr.mxu0 0.0
        %435 = vmatpush1.msra.mxu0 0.0
        %436 = vmatprep.subr.mxu0 0.0
        %437 = vmatpush1.msra.mxu0 0.0
        %438 = vmatprep.subr.mxu0 0.0
        %439 = vmatpush1.msra.mxu0 0.0
        %440 = vmatprep.subr.mxu0 0.0
        %441 = vmatpush1.msra.mxu0 0.0
        %442 = vmatprep.subr.mxu0 0.0
        %443 = vmatpush1.msra.mxu0 0.0
        %444 = vmatprep.subr.mxu0 0.0
        %445 = vmatpush1.msra.mxu0 0.0
        %446 = vmatprep.subr.mxu0 0.0
        %447 = vmatpush1.msra.mxu0 0.0
        %448 = vmatprep.subr.mxu0 0.0
        %449 = vmatpush1.msra.mxu0 0.0
        %450 = vmatprep.subr.mxu0 0.0
        %451 = vmatpush1.msra.mxu0 0.0
        %452 = vmatprep.mubr.f32.mxu0 0.0
        %453 = vmatmul.mubr.f32.gmra.mrb[0].mxu0 %v341
        %v454 = vpop.f32.mrb[0].mxu0
        %v455 = vadd.f32 %v337, %v454
        %v456 = vpop.f32.mrb[0].mxu0
        %457 = vmatprep.mubr.f32.mxu0 0.0
        %458 = vmatmul.mubr.f32.gmra.mrb[0].mxu0 %v344
        %v459 = vpop.f32.mrb[0].mxu0
        %v460 = vadd.f32 %v337, %v459
        %v461 = vpop.f32.mrb[0].mxu0
        %462 = vmatprep.mubr.f32.mxu0 0.0
        %463 = vmatmul.mubr.f32.gmra.mrb[0].mxu0 %v347
        %v464 = vpop.f32.mrb[0].mxu0
        %v465 = vadd.f32 %v337, %v464
        %v466 = vpop.f32.mrb[0].mxu0
        %467 = vmatprep.mubr.f32.mxu0 0.0
        %468 = vmatmul.mubr.f32.gmra.mrb[0].mxu0 %v350
        %v469 = vpop.f32.mrb[0].mxu0
        %v470 = vadd.f32 %v337, %v469
        %v471 = vpop.f32.mrb[0].mxu0
        %472 = vmatprep.mubr.f32.mxu0 0.0
        %473 = vmatmul.mubr.f32.gmra.mrb[0].mxu0 %v353
        %v474 = vpop.f32.mrb[0].mxu0
        %v475 = vadd.f32 %v337, %v474
        %v476 = vpop.f32.mrb[0].mxu0
        %477 = vmatprep.mubr.f32.mxu0 0.0
        %478 = vmatmul.mubr.f32.gmra.mrb[0].mxu0 %v356
        %v479 = vpop.f32.mrb[0].mxu0
        %v480 = vadd.f32 %v337, %v479
        %v481 = vpop.f32.mrb[0].mxu0
        %482 = vmatprep.mubr.f32.mxu0 0.0
        %483 = vmatmul.mubr.f32.gmra.mrb[0].mxu0 %v359
        %v484 = vpop.f32.mrb[0].mxu0
        %v485 = vadd.f32 %v337, %v484
        %v486 = vpop.f32.mrb[0].mxu0
        %487 = vmatprep.mubr.f32.mxu0 0.0
        %488 = vmatmul.mubr.f32.gmra.mrb[0].mxu0 %v362
        %v489 = vpop.f32.mrb[0].mxu0
        %v490 = vadd.f32 %v337, %v489
        %v491 = vpop.f32.mrb[0].mxu0
        %492 = vmatprep.mubr.f32.mxu0 0.0
        %493 = vmatmul.mubr.f32.gmra.mrb[0].mxu0 %v365
        %v494 = vpop.f32.mrb[0].mxu0
        %v495 = vadd.f32 %v337, %v494
        %v496 = vpop.f32.mrb[0].mxu0
        %497 = vmatprep.mubr.f32.mxu0 0.0
        %498 = vmatmul.mubr.f32.gmra.mrb[0].mxu0 %v368
        %v499 = vpop.f32.mrb[0].mxu0
        %v500 = vadd.f32 %v337, %v499
        %v501 = vpop.f32.mrb[0].mxu0
        %502 = vmatprep.mubr.f32.mxu0 0.0
        %503 = vmatmul.mubr.f32.gmra.mrb[0].mxu0 %v371
        %v504 = vpop.f32.mrb[0].mxu0
        %v505 = vadd.f32 %v337, %v504
        %v506 = vpop.f32.mrb[0].mxu0
        %507 = vmatprep.mubr.f32.mxu0 0.0
        %508 = vmatmul.mubr.f32.gmra.mrb[0].mxu0 %v374
        %v509 = vpop.f32.mrb[0].mxu0
        %v510 = vadd.f32 %v337, %v509
        %v511 = vpop.f32.mrb[0].mxu0
        %512 = vmatprep.mubr.f32.mxu0 0.0
        %513 = vmatmul.mubr.f32.gmra.mrb[0].mxu0 %v377
        %v514 = vpop.f32.mrb[0].mxu0
        %v515 = vadd.f32 %v337, %v514
        %v516 = vpop.f32.mrb[0].mxu0
        %517 = vmatprep.mubr.f32.mxu0 0.0
        %518 = vmatmul.mubr.f32.gmra.mrb[0].mxu0 %v380
        %v519 = vpop.f32.mrb[0].mxu0
        %v520 = vadd.f32 %v337, %v519
        %v521 = vpop.f32.mrb[0].mxu0
        %522 = vmatprep.mubr.f32.mxu0 0.0
        %523 = vmatmul.mubr.f32.gmra.mrb[0].mxu0 %v383
        %v524 = vpop.f32.mrb[0].mxu0
        %v525 = vadd.f32 %v337, %v524
        %v526 = vpop.f32.mrb[0].mxu0
        %527 = vmatprep.mubr.f32.mxu0 0.0
        %528 = vmatmul.mubr.f32.gmra.mrb[0].mxu0 %v386
        %v529 = vpop.f32.mrb[0].mxu0
        %v530 = vadd.f32 %v337, %v529
        %v531 = vpop.f32.mrb[0].mxu0
        %532 = vdwg.mxu0
        %v533 = vtanh.pop %v455
        %v534 = vtanh.pop %v460
        %v535 = vtanh.pop %v465
        %v536 = vtanh.pop %v470
        %v537 = vtanh.pop %v475
        %v538 = vtanh.pop %v480
        %v539 = vtanh.pop %v485
        %v540 = vtanh.pop %v490
        %v541 = vtanh.pop %v495
        %v542 = vtanh.pop %v500
        %v543 = vtanh.pop %v505
        %v544 = vtanh.pop %v510
        %v545 = vtanh.pop %v515
        %v546 = vtanh.pop %v520
        %v547 = vtanh.pop %v525
        %v548 = vtanh.pop %v530
        %v549 = vld [vmem:[%s4] sm:$0xff]
        %v550 = vld [vmem:[%s4 + $0x8] sm:$0xff]
        %v551 = vld [vmem:[%s4 + $0x10] sm:$0xff]
        %v552 = vld [vmem:[%s4 + $0x18] sm:$0xff]
        %v553 = vld [vmem:[%s5] sm:$0x1]
        %v555 = vlaneseq
        %v556 = vshrl.u32 %v555, 7
        %v557 = vsub.s32 0, %v556
        %v558 = vrot.slane %v553, %v557
        %vm560 = vcmask 261120
        %v562 = vsel %vm560, %v533, 0
        %v565 = vsel %vm560, %v534, 0
        %v568 = vsel %vm560, %v535, 0
        %v571 = vsel %vm560, %v536, 0
        %v574 = vsel %vm560, %v537, 0
        %v577 = vsel %vm560, %v538, 0
        %v580 = vsel %vm560, %v539, 0
        %v583 = vsel %vm560, %v540, 0
        %v586 = vsel %vm560, %v541, 0
        %v589 = vsel %vm560, %v542, 0
        %v592 = vsel %vm560, %v543, 0
        %v595 = vsel %vm560, %v544, 0
        %v598 = vsel %vm560, %v545, 0
        %v601 = vsel %vm560, %v546, 0
        %v604 = vsel %vm560, %v547, 0
        %v607 = vsel %vm560, %v548, 0
        %609 = vmatprep.subr.mxu0 0.0
        %610 = vmatpush1.msra.mxu0 %v549
        %611 = vmatprep.subr.mxu0 0.0
        %612 = vmatpush1.msra.mxu0 %v550
        %613 = vmatprep.subr.mxu0 0.0
        %614 = vmatpush1.msra.mxu0 %v551
        %615 = vmatprep.subr.mxu0 0.0
        %616 = vmatpush1.msra.mxu0 %v552
        %617 = vmatprep.subr.mxu0 0.0
        %618 = vmatpush1.msra.mxu0 0.0
        %619 = vmatprep.subr.mxu0 0.0
        %620 = vmatpush1.msra.mxu0 0.0
        %621 = vmatprep.subr.mxu0 0.0
        %622 = vmatpush1.msra.mxu0 0.0
        %623 = vmatprep.subr.mxu0 0.0
        %624 = vmatpush1.msra.mxu0 0.0
        %625 = vmatprep.subr.mxu0 0.0
        %626 = vmatpush1.msra.mxu0 0.0
        %627 = vmatprep.subr.mxu0 0.0
        %628 = vmatpush1.msra.mxu0 0.0
        %629 = vmatprep.subr.mxu0 0.0
        %630 = vmatpush1.msra.mxu0 0.0
        %631 = vmatprep.subr.mxu0 0.0
        %632 = vmatpush1.msra.mxu0 0.0
        %633 = vmatprep.subr.mxu0 0.0
        %634 = vmatpush1.msra.mxu0 0.0
        %635 = vmatprep.subr.mxu0 0.0
        %636 = vmatpush1.msra.mxu0 0.0
        %637 = vmatprep.subr.mxu0 0.0
        %638 = vmatpush1.msra.mxu0 0.0
        %639 = vmatprep.subr.mxu0 0.0
        %640 = vmatpush1.msra.mxu0 0.0
        %641 = vmatprep.subr.mxu0 0.0
        %642 = vmatpush1.msra.mxu0 0.0
        %643 = vmatprep.subr.mxu0 0.0
        %644 = vmatpush1.msra.mxu0 0.0
        %645 = vmatprep.subr.mxu0 0.0
        %646 = vmatpush1.msra.mxu0 0.0
        %647 = vmatprep.subr.mxu0 0.0
        %648 = vmatpush1.msra.mxu0 0.0
        %649 = vmatprep.subr.mxu0 0.0
        %650 = vmatpush1.msra.mxu0 0.0
        %651 = vmatprep.subr.mxu0 0.0
        %652 = vmatpush1.msra.mxu0 0.0
        %653 = vmatprep.subr.mxu0 0.0
        %654 = vmatpush1.msra.mxu0 0.0
        %655 = vmatprep.subr.mxu0 0.0
        %656 = vmatpush1.msra.mxu0 0.0
        %657 = vmatprep.subr.mxu0 0.0
        %658 = vmatpush1.msra.mxu0 0.0
        %659 = vmatprep.subr.mxu0 0.0
        %660 = vmatpush1.msra.mxu0 0.0
        %661 = vmatprep.subr.mxu0 0.0
        %662 = vmatpush1.msra.mxu0 0.0
        %663 = vmatprep.subr.mxu0 0.0
        %664 = vmatpush1.msra.mxu0 0.0
        %665 = vmatprep.subr.mxu0 0.0
        %666 = vmatpush1.msra.mxu0 0.0
        %667 = vmatprep.subr.mxu0 0.0
        %668 = vmatpush1.msra.mxu0 0.0
        %669 = vmatprep.subr.mxu0 0.0
        %670 = vmatpush1.msra.mxu0 0.0
        %671 = vmatprep.subr.mxu0 0.0
        %672 = vmatpush1.msra.mxu0 0.0
        %673 = vmatprep.mubr.f32.mxu0 0.0
        %674 = vmatmul.mubr.f32.gmra.mrb[0].mxu0 %v562
        %v675 = vpop.f32.mrb[0].mxu0
        %v676 = vadd.f32 %v558, %v675
        %v677 = vpop.f32.mrb[0].mxu0
        %678 = vmatprep.mubr.f32.mxu0 0.0
        %679 = vmatmul.mubr.f32.gmra.mrb[0].mxu0 %v565
        %v680 = vpop.f32.mrb[0].mxu0
        %v681 = vadd.f32 %v558, %v680
        %v682 = vpop.f32.mrb[0].mxu0
        %683 = vmatprep.mubr.f32.mxu0 0.0
        %684 = vmatmul.mubr.f32.gmra.mrb[0].mxu0 %v568
        %v685 = vpop.f32.mrb[0].mxu0
        %v686 = vadd.f32 %v558, %v685
        %v687 = vpop.f32.mrb[0].mxu0
        %688 = vmatprep.mubr.f32.mxu0 0.0
        %689 = vmatmul.mubr.f32.gmra.mrb[0].mxu0 %v571
        %v690 = vpop.f32.mrb[0].mxu0
        %v691 = vadd.f32 %v558, %v690
        %v692 = vpop.f32.mrb[0].mxu0
        %693 = vmatprep.mubr.f32.mxu0 0.0
        %694 = vmatmul.mubr.f32.gmra.mrb[0].mxu0 %v574
        %v695 = vpop.f32.mrb[0].mxu0
        %v696 = vadd.f32 %v558, %v695
        %v697 = vpop.f32.mrb[0].mxu0
        %698 = vmatprep.mubr.f32.mxu0 0.0
        %699 = vmatmul.mubr.f32.gmra.mrb[0].mxu0 %v577
        %v700 = vpop.f32.mrb[0].mxu0
        %v701 = vadd.f32 %v558, %v700
        %v702 = vpop.f32.mrb[0].mxu0
        %703 = vmatprep.mubr.f32.mxu0 0.0
        %704 = vmatmul.mubr.f32.gmra.mrb[0].mxu0 %v580
        %v705 = vpop.f32.mrb[0].mxu0
        %v706 = vadd.f32 %v558, %v705
        %v707 = vpop.f32.mrb[0].mxu0
        %708 = vmatprep.mubr.f32.mxu0 0.0
        %709 = vmatmul.mubr.f32.gmra.mrb[0].mxu0 %v583
        %v710 = vpop.f32.mrb[0].mxu0
        %v711 = vadd.f32 %v558, %v710
        %v712 = vpop.f32.mrb[0].mxu0
        %713 = vmatprep.mubr.f32.mxu0 0.0
        %714 = vmatmul.mubr.f32.gmra.mrb[0].mxu0 %v586
        %v715 = vpop.f32.mrb[0].mxu0
        %v716 = vadd.f32 %v558, %v715
        %v717 = vpop.f32.mrb[0].mxu0
        %718 = vmatprep.mubr.f32.mxu0 0.0
        %719 = vmatmul.mubr.f32.gmra.mrb[0].mxu0 %v589
        %v720 = vpop.f32.mrb[0].mxu0
        %v721 = vadd.f32 %v558, %v720
        %v722 = vpop.f32.mrb[0].mxu0
        %723 = vmatprep.mubr.f32.mxu0 0.0
        %724 = vmatmul.mubr.f32.gmra.mrb[0].mxu0 %v592
        %v725 = vpop.f32.mrb[0].mxu0
        %v726 = vadd.f32 %v558, %v725
        %v727 = vpop.f32.mrb[0].mxu0
        %728 = vmatprep.mubr.f32.mxu0 0.0
        %729 = vmatmul.mubr.f32.gmra.mrb[0].mxu0 %v595
        %v730 = vpop.f32.mrb[0].mxu0
        %v731 = vadd.f32 %v558, %v730
        %v732 = vpop.f32.mrb[0].mxu0
        %733 = vmatprep.mubr.f32.mxu0 0.0
        %734 = vmatmul.mubr.f32.gmra.mrb[0].mxu0 %v598
        %v735 = vpop.f32.mrb[0].mxu0
        %v736 = vadd.f32 %v558, %v735
        %v737 = vpop.f32.mrb[0].mxu0
        %738 = vmatprep.mubr.f32.mxu0 0.0
        %739 = vmatmul.mubr.f32.gmra.mrb[0].mxu0 %v601
        %v740 = vpop.f32.mrb[0].mxu0
        %v741 = vadd.f32 %v558, %v740
        %v742 = vpop.f32.mrb[0].mxu0
        %743 = vmatprep.mubr.f32.mxu0 0.0
        %744 = vmatmul.mubr.f32.gmra.mrb[0].mxu0 %v604
        %v745 = vpop.f32.mrb[0].mxu0
        %v746 = vadd.f32 %v558, %v745
        %v747 = vpop.f32.mrb[0].mxu0
        %748 = vmatprep.mubr.f32.mxu0 0.0
        %749 = vmatmul.mubr.f32.gmra.mrb[0].mxu0 %v607
        %v750 = vpop.f32.mrb[0].mxu0
        %v751 = vadd.f32 %v558, %v750
        %v752 = vpop.f32.mrb[0].mxu0
        %753 = vdwg.mxu0
        %v754 = vmul.f32 %v676, 0.5
        %v755 = vmul.f32 %v681, 0.5
        %v756 = vmul.f32 %v686, 0.5
        %v757 = vmul.f32 %v691, 0.5
        %v758 = vmul.f32 %v696, 0.5
        %v759 = vmul.f32 %v701, 0.5
        %v760 = vmul.f32 %v706, 0.5
        %v761 = vmul.f32 %v711, 0.5
        %v762 = vmul.f32 %v716, 0.5
        %v763 = vmul.f32 %v721, 0.5
        %v764 = vmul.f32 %v726, 0.5
        %v765 = vmul.f32 %v731, 0.5
        %v766 = vmul.f32 %v736, 0.5
        %v767 = vmul.f32 %v741, 0.5
        %v768 = vmul.f32 %v746, 0.5
        %v769 = vmul.f32 %v751, 0.5
        %v770 = vtanh.pop %v754
        %v771 = vtanh.pop %v755
        %v772 = vtanh.pop %v756
        %v773 = vtanh.pop %v757
        %v774 = vtanh.pop %v758
        %v775 = vtanh.pop %v759
        %v776 = vtanh.pop %v760
        %v777 = vtanh.pop %v761
        %v778 = vtanh.pop %v762
        %v779 = vtanh.pop %v763
        %v780 = vtanh.pop %v764
        %v781 = vtanh.pop %v765
        %v782 = vtanh.pop %v766
        %v783 = vtanh.pop %v767
        %v784 = vtanh.pop %v768
        %v785 = vtanh.pop %v769
        %v786 = vmul.f32 %v770, 0.5
        %v787 = vmul.f32 %v771, 0.5
        %v788 = vmul.f32 %v772, 0.5
        %v789 = vmul.f32 %v773, 0.5
        %v790 = vmul.f32 %v774, 0.5
        %v791 = vmul.f32 %v775, 0.5
        %v792 = vmul.f32 %v776, 0.5
        %v793 = vmul.f32 %v777, 0.5
        %v794 = vmul.f32 %v778, 0.5
        %v795 = vmul.f32 %v779, 0.5
        %v796 = vmul.f32 %v780, 0.5
        %v797 = vmul.f32 %v781, 0.5
        %v798 = vmul.f32 %v782, 0.5
        %v799 = vmul.f32 %v783, 0.5
        %v800 = vmul.f32 %v784, 0.5
        %v801 = vmul.f32 %v785, 0.5
        %v802 = vadd.f32 %v786, 0.5
        %v803 = vadd.f32 %v787, 0.5
        %v804 = vadd.f32 %v788, 0.5
        %v805 = vadd.f32 %v789, 0.5
        %v806 = vadd.f32 %v790, 0.5
        %v807 = vadd.f32 %v791, 0.5
        %v808 = vadd.f32 %v792, 0.5
        %v809 = vadd.f32 %v793, 0.5
        %v810 = vadd.f32 %v794, 0.5
        %v811 = vadd.f32 %v795, 0.5
        %v812 = vadd.f32 %v796, 0.5
        %v813 = vadd.f32 %v797, 0.5
        %v814 = vadd.f32 %v798, 0.5
        %v815 = vadd.f32 %v799, 0.5
        %v816 = vadd.f32 %v800, 0.5
        %v817 = vadd.f32 %v801, 0.5
        %v818 = vld [vmem:[%s304] sm:$0xff]
        %v819 = vld [vmem:[%s304 + $0x8] sm:$0xff]
        %v820 = vld [vmem:[%s304 + $0x10] sm:$0xff]
        %v821 = vld [vmem:[%s304 + $0x18] sm:$0xff]
        %v822 = vld [vmem:[%s304 + $0x20] sm:$0xff]
        %v823 = vld [vmem:[%s304 + $0x28] sm:$0xff]
        %v824 = vld [vmem:[%s304 + $0x30] sm:$0xff]
        %v825 = vld [vmem:[%s304 + $0x38] sm:$0xff]
        %v826 = vld [vmem:[%s304 + $0x40] sm:$0xff]
        %v827 = vld [vmem:[%s304 + $0x48] sm:$0xff]
        %v828 = vld [vmem:[%s304 + $0x50] sm:$0xff]
        %v829 = vld [vmem:[%s304 + $0x58] sm:$0xff]
        %v830 = vld [vmem:[%s304 + $0x60] sm:$0xff]
        %v831 = vld [vmem:[%s304 + $0x68] sm:$0xff]
        %v832 = vld [vmem:[%s304 + $0x70] sm:$0xff]
        %v833 = vld [vmem:[%s304 + $0x78] sm:$0xff]
        %v834 = vmul.f32 %v802, %v818
        %v835 = vmul.f32 %v803, %v819
        %v836 = vmul.f32 %v804, %v820
        %v837 = vmul.f32 %v805, %v821
        %v838 = vmul.f32 %v806, %v822
        %v839 = vmul.f32 %v807, %v823
        %v840 = vmul.f32 %v808, %v824
        %v841 = vmul.f32 %v809, %v825
        %v842 = vmul.f32 %v810, %v826
        %v843 = vmul.f32 %v811, %v827
        %v844 = vmul.f32 %v812, %v828
        %v845 = vmul.f32 %v813, %v829
        %v846 = vmul.f32 %v814, %v830
        %v847 = vmul.f32 %v815, %v831
        %v848 = vmul.f32 %v816, %v832
        %v849 = vmul.f32 %v817, %v833
        %vm850 = vcmask 523264
        %v851 = vsel %vm850, %v834, 0.0
        %852 = vadd.xlane.f32.xlu0 %v851
        %v853 = vpop.xlane.xlu0 %852
        %v854 = vsel %vm850, %v835, 0.0
        %855 = vadd.xlane.f32.xlu0 %v854
        %v856 = vpop.xlane.xlu0 %855
        %v857 = vsel %vm850, %v836, 0.0
        %858 = vadd.xlane.f32.xlu0 %v857
        %v859 = vpop.xlane.xlu0 %858
        %v860 = vsel %vm850, %v837, 0.0
        %861 = vadd.xlane.f32.xlu0 %v860
        %v862 = vpop.xlane.xlu0 %861
        %v863 = vsel %vm850, %v838, 0.0
        %864 = vadd.xlane.f32.xlu0 %v863
        %v865 = vpop.xlane.xlu0 %864
        %v866 = vsel %vm850, %v839, 0.0
        %867 = vadd.xlane.f32.xlu0 %v866
        %v868 = vpop.xlane.xlu0 %867
        %v869 = vsel %vm850, %v840, 0.0
        %870 = vadd.xlane.f32.xlu0 %v869
        %v871 = vpop.xlane.xlu0 %870
        %v872 = vsel %vm850, %v841, 0.0
        %873 = vadd.xlane.f32.xlu0 %v872
        %v874 = vpop.xlane.xlu0 %873
        %v875 = vsel %vm850, %v842, 0.0
        %876 = vadd.xlane.f32.xlu0 %v875
        %v877 = vpop.xlane.xlu0 %876
        %v878 = vsel %vm850, %v843, 0.0
        %879 = vadd.xlane.f32.xlu0 %v878
        %v880 = vpop.xlane.xlu0 %879
        %v881 = vsel %vm850, %v844, 0.0
        %882 = vadd.xlane.f32.xlu0 %v881
        %v883 = vpop.xlane.xlu0 %882
        %v884 = vsel %vm850, %v845, 0.0
        %885 = vadd.xlane.f32.xlu0 %v884
        %v886 = vpop.xlane.xlu0 %885
        %v887 = vsel %vm850, %v846, 0.0
        %888 = vadd.xlane.f32.xlu0 %v887
        %v889 = vpop.xlane.xlu0 %888
        %v890 = vsel %vm850, %v847, 0.0
        %891 = vadd.xlane.f32.xlu0 %v890
        %v892 = vpop.xlane.xlu0 %891
        %v893 = vsel %vm850, %v848, 0.0
        %894 = vadd.xlane.f32.xlu0 %v893
        %v895 = vpop.xlane.xlu0 %894
        %v896 = vsel %vm850, %v849, 0.0
        %897 = vadd.xlane.f32.xlu0 %v896
        %v898 = vpop.xlane.xlu0 %897
        %vm899 = vcmask 7168
        %900 = vst.msk [vmem:[%s281] sm:$0xff] %vm899, %v853
        %901 = vst.msk [vmem:[%s281 + $0x8] sm:$0xff] %vm899, %v856
        %902 = vst.msk [vmem:[%s281 + $0x10] sm:$0xff] %vm899, %v859
        %903 = vst.msk [vmem:[%s281 + $0x18] sm:$0xff] %vm899, %v862
        %904 = vst.msk [vmem:[%s281 + $0x20] sm:$0xff] %vm899, %v865
        %905 = vst.msk [vmem:[%s281 + $0x28] sm:$0xff] %vm899, %v868
        %906 = vst.msk [vmem:[%s281 + $0x30] sm:$0xff] %vm899, %v871
        %907 = vst.msk [vmem:[%s281 + $0x38] sm:$0xff] %vm899, %v874
        %908 = vst.msk [vmem:[%s281 + $0x40] sm:$0xff] %vm899, %v877
        %909 = vst.msk [vmem:[%s281 + $0x48] sm:$0xff] %vm899, %v880
        %910 = vst.msk [vmem:[%s281 + $0x50] sm:$0xff] %vm899, %v883
        %911 = vst.msk [vmem:[%s281 + $0x58] sm:$0xff] %vm899, %v886
        %912 = vst.msk [vmem:[%s281 + $0x60] sm:$0xff] %vm899, %v889
        %913 = vst.msk [vmem:[%s281 + $0x68] sm:$0xff] %vm899, %v892
        %914 = vst.msk [vmem:[%s281 + $0x70] sm:$0xff] %vm899, %v895
        %915 = vst.msk [vmem:[%s281 + $0x78] sm:$0xff] %vm899, %v898
        %s916 = sand.u32 %s161, 1
        %s917 = sand.u32 %s161, 1
        %s918 = smul.addr %s917, 128
        %s919 = scalar_lea.vmem [#allocation2], %s918
        // Predicated region
        $region45: #{attenuation_fraction_sub.1} parent=43 // pred_check
          %p920 = pneg %p171
        $region46: #{attenuation_fraction_sub.1} parent=43 // pred_check_branch
          %922 = sbr.rel (%p920) target = $region48
        $region47: #{attenuation_fraction_sub.1} parent=43 // pred_region
          %s923 = smul.u32 16, %s17
          %s924 = ssub.s32 38, %s923
          %p925 = scmp.lt.s32.totalorder %s924, 16
          %s926 = scalar_select %p925, %s924, 16
          %s927 = smul.u32 128, %s926
          %p928 = scmp.ne.s32.totalorder 0, %s927
          %s929 = smul.addr %s923, 8
          %s930 = scalar_lea.vmem %s6, %s929
          // Predicated region
          $region49: #{attenuation_fraction_sub.1} parent=47 // pred_check
            %p931 = pneg %p928
          $region50: #{attenuation_fraction_sub.1} parent=47 // pred_check_branch
            %933 = sbr.rel (%p931) target = $region52
          $region51: #{attenuation_fraction_sub.1} parent=47 // pred_region
            // Predicated region
            $region53: #{attenuation_fraction_sub.1} parent=51 // pred_check
              _
            $region54: #{attenuation_fraction_sub.1} parent=51 // pred_check_branch
              %935 = sbr.rel (0) target = $region56
            $region55: #{attenuation_fraction_sub.1} parent=51 // pred_region
              // Predicated region
              $region75: #{attenuation_fraction_sub.1} parent=55 // pred_check
                _
              $region76: #{attenuation_fraction_sub.1} parent=55 // pred_check_branch
                %1014 = sbr.rel (0) target = $region78
              $region77: #{attenuation_fraction_sub.1} parent=55 // pred_region
                %s1015 = sshrl.u32 %s926, 4
                // While loop
                $region79: #{attenuation_fraction_sub.1} parent=77 // loop_pre_header
                  _
                $region80: #{attenuation_fraction_sub.1} parent=77 // loop_header
                  %s1017 = sphi 0, %s1019
                  %p1018 = scmp.ge.s32.totalorder %s1017, %s1015
                  %s1022 = sphi 0, %s1059
                  %s1023 = sphi %s919, %s1062
                  %s1024 = sphi %s930, %s1063
                $region81: #{attenuation_fraction_sub.1} parent=77 // loop_header_branch
                  %1021 = sbr.rel (%p1018) target = $region85
                $region82: #{attenuation_fraction_sub.1} parent=77 // loop_body
                  %v1025 = vld [vmem:[%s1023] sm:$0xff]
                  %1026 = vst [vmem:[%s1024] sm:$0xff] %v1025
                  %v1027 = vld [vmem:[%s1023 + $0x8] sm:$0xff]
                  %1028 = vst [vmem:[%s1024 + $0x8] sm:$0xff] %v1027
                  %v1029 = vld [vmem:[%s1023 + $0x10] sm:$0xff]
                  %1030 = vst [vmem:[%s1024 + $0x10] sm:$0xff] %v1029
                  %v1031 = vld [vmem:[%s1023 + $0x18] sm:$0xff]
                  %1032 = vst [vmem:[%s1024 + $0x18] sm:$0xff] %v1031
                  %v1033 = vld [vmem:[%s1023 + $0x20] sm:$0xff]
                  %1034 = vst [vmem:[%s1024 + $0x20] sm:$0xff] %v1033
                  %v1035 = vld [vmem:[%s1023 + $0x28] sm:$0xff]
                  %1036 = vst [vmem:[%s1024 + $0x28] sm:$0xff] %v1035
                  %v1037 = vld [vmem:[%s1023 + $0x30] sm:$0xff]
                  %1038 = vst [vmem:[%s1024 + $0x30] sm:$0xff] %v1037
                  %v1039 = vld [vmem:[%s1023 + $0x38] sm:$0xff]
                  %1040 = vst [vmem:[%s1024 + $0x38] sm:$0xff] %v1039
                  %v1041 = vld [vmem:[%s1023 + $0x40] sm:$0xff]
                  %1042 = vst [vmem:[%s1024 + $0x40] sm:$0xff] %v1041
                  %v1043 = vld [vmem:[%s1023 + $0x48] sm:$0xff]
                  %1044 = vst [vmem:[%s1024 + $0x48] sm:$0xff] %v1043
                  %v1045 = vld [vmem:[%s1023 + $0x50] sm:$0xff]
                  %1046 = vst [vmem:[%s1024 + $0x50] sm:$0xff] %v1045
                  %v1047 = vld [vmem:[%s1023 + $0x58] sm:$0xff]
                  %1048 = vst [vmem:[%s1024 + $0x58] sm:$0xff] %v1047
                  %v1049 = vld [vmem:[%s1023 + $0x60] sm:$0xff]
                  %1050 = vst [vmem:[%s1024 + $0x60] sm:$0xff] %v1049
                  %v1051 = vld [vmem:[%s1023 + $0x68] sm:$0xff]
                  %1052 = vst [vmem:[%s1024 + $0x68] sm:$0xff] %v1051
                  %v1053 = vld [vmem:[%s1023 + $0x70] sm:$0xff]
                  %1054 = vst [vmem:[%s1024 + $0x70] sm:$0xff] %v1053
                  %v1055 = vld [vmem:[%s1023 + $0x78] sm:$0xff]
                  %1056 = vst [vmem:[%s1024 + $0x78] sm:$0xff] %v1055
                  %s1057 = sadd.s32 1, %s1022
                  %p1058 = scmp.ge.s32.totalorder %s1057, %s1015
                  %s1059 = scalar_select %p1058, 0, %s1057
                  %s1060 = smul.u32 %s1059, 128
                  %s1061 = smul.u32 %s1059, 128
                  %s1062 = scalar_lea.vmem %s919, %s1060 [#allocation2]
                  %s1063 = scalar_lea.vmem %s930, %s1061
                $region83: #{attenuation_fraction_sub.1} parent=77 // loop_footer
                  %s1019 = sadd.s32 %s1017, 1
                $region84: #{attenuation_fraction_sub.1} parent=77 // loop_footer_branch
                  %1016 = sbr.rel target = $region80
                $region85: #{attenuation_fraction_sub.1} parent=77 // loop_exit
                  _
                %s1064 = sshrl.u32 %s926, 4
                %s1065 = sand.u32 %s926, 15
                %s1066 = smul.u32 %s1064, 16
                %s1067 = smul.u32 8, %s1066
                %s1068 = scalar_lea.vmem %s919, %s1067 [#allocation2]
                %s1069 = smul.u32 8, %s1066
                %s1070 = scalar_lea.vmem %s930, %s1069
                // While loop
                $region86: #{attenuation_fraction_sub.1} parent=77 // loop_pre_header
                  _
                $region87: #{attenuation_fraction_sub.1} parent=77 // loop_header
                  %s1072 = sphi 0, %s1074
                  %p1073 = scmp.ge.s32.totalorder %s1072, %s1065
                  %s1077 = sphi 0, %s1084
                  %s1078 = sphi %s1068, %s1087
                  %s1079 = sphi %s1070, %s1088
                $region88: #{attenuation_fraction_sub.1} parent=77 // loop_header_branch
                  %1076 = sbr.rel (%p1073) target = $region92
                $region89: #{attenuation_fraction_sub.1} parent=77 // loop_body
                  %v1080 = vld [vmem:[%s1078] sm:$0xff]
                  %1081 = vst [vmem:[%s1079] sm:$0xff] %v1080
                  %s1082 = sadd.s32 1, %s1077
                  %p1083 = scmp.ge.s32.totalorder %s1082, %s1065
                  %s1084 = scalar_select %p1083, 0, %s1082
                  %s1085 = smul.u32 %s1084, 8
                  %s1086 = smul.u32 %s1084, 8
                  %s1087 = scalar_lea.vmem %s1068, %s1085 [#allocation2]
                  %s1088 = scalar_lea.vmem %s1070, %s1086
                $region90: #{attenuation_fraction_sub.1} parent=77 // loop_footer
                  %s1074 = sadd.s32 %s1072, 1
                $region91: #{attenuation_fraction_sub.1} parent=77 // loop_footer_branch
                  %1071 = sbr.rel target = $region87
                $region92: #{attenuation_fraction_sub.1} parent=77 // loop_exit
                  _
              $region78: #{attenuation_fraction_sub.1} parent=55 // pred_fallthru
                _
              // Predicated region
              $region93: #{attenuation_fraction_sub.1} parent=55 // pred_check
                _
              $region94: #{attenuation_fraction_sub.1} parent=55 // pred_check_branch
                %1090 = sbr.rel target = $region96
              $region95: #{attenuation_fraction_sub.1} parent=55 // pred_region
                _
              $region96: #{attenuation_fraction_sub.1} parent=55 // pred_fallthru
                _
            $region56: #{attenuation_fraction_sub.1} parent=51 // pred_fallthru
              _
            // Predicated region
            $region57: #{attenuation_fraction_sub.1} parent=51 // pred_check
              _
            $region58: #{attenuation_fraction_sub.1} parent=51 // pred_check_branch
              %937 = sbr.rel target = $region60
            $region59: #{attenuation_fraction_sub.1} parent=51 // pred_region
              %s939 = sshrl.u32 %s926, 4
              // While loop
              $region61: #{attenuation_fraction_sub.1} parent=59 // loop_pre_header
                _
              $region62: #{attenuation_fraction_sub.1} parent=59 // loop_header
                %s941 = sphi 0, %s943
                %p942 = scmp.ge.s32.totalorder %s941, %s939
                %s946 = sphi 0, %s983
                %s947 = sphi %s919, %s986
                %s948 = sphi %s930, %s987
              $region63: #{attenuation_fraction_sub.1} parent=59 // loop_header_branch
                %945 = sbr.rel (%p942) target = $region67
              $region64: #{attenuation_fraction_sub.1} parent=59 // loop_body
                %v949 = vld [vmem:[%s947] sm:$0xff]
                %950 = vst [vmem:[%s948] sm:$0xff] %v949
                %v951 = vld [vmem:[%s947 + $0x8] sm:$0xff]
                %952 = vst [vmem:[%s948 + $0x8] sm:$0xff] %v951
                %v953 = vld [vmem:[%s947 + $0x10] sm:$0xff]
                %954 = vst [vmem:[%s948 + $0x10] sm:$0xff] %v953
                %v955 = vld [vmem:[%s947 + $0x18] sm:$0xff]
                %956 = vst [vmem:[%s948 + $0x18] sm:$0xff] %v955
                %v957 = vld [vmem:[%s947 + $0x20] sm:$0xff]
                %958 = vst [vmem:[%s948 + $0x20] sm:$0xff] %v957
                %v959 = vld [vmem:[%s947 + $0x28] sm:$0xff]
                %960 = vst [vmem:[%s948 + $0x28] sm:$0xff] %v959
                %v961 = vld [vmem:[%s947 + $0x30] sm:$0xff]
                %962 = vst [vmem:[%s948 + $0x30] sm:$0xff] %v961
                %v963 = vld [vmem:[%s947 + $0x38] sm:$0xff]
                %964 = vst [vmem:[%s948 + $0x38] sm:$0xff] %v963
                %v965 = vld [vmem:[%s947 + $0x40] sm:$0xff]
                %966 = vst [vmem:[%s948 + $0x40] sm:$0xff] %v965
                %v967 = vld [vmem:[%s947 + $0x48] sm:$0xff]
                %968 = vst [vmem:[%s948 + $0x48] sm:$0xff] %v967
                %v969 = vld [vmem:[%s947 + $0x50] sm:$0xff]
                %970 = vst [vmem:[%s948 + $0x50] sm:$0xff] %v969
                %v971 = vld [vmem:[%s947 + $0x58] sm:$0xff]
                %972 = vst [vmem:[%s948 + $0x58] sm:$0xff] %v971
                %v973 = vld [vmem:[%s947 + $0x60] sm:$0xff]
                %974 = vst [vmem:[%s948 + $0x60] sm:$0xff] %v973
                %v975 = vld [vmem:[%s947 + $0x68] sm:$0xff]
                %976 = vst [vmem:[%s948 + $0x68] sm:$0xff] %v975
                %v977 = vld [vmem:[%s947 + $0x70] sm:$0xff]
                %978 = vst [vmem:[%s948 + $0x70] sm:$0xff] %v977
                %v979 = vld [vmem:[%s947 + $0x78] sm:$0xff]
                %980 = vst [vmem:[%s948 + $0x78] sm:$0xff] %v979
                %s981 = sadd.s32 1, %s946
                %p982 = scmp.ge.s32.totalorder %s981, %s939
                %s983 = scalar_select %p982, 0, %s981
                %s984 = smul.u32 %s983, 128
                %s985 = smul.u32 %s983, 128
                %s986 = scalar_lea.vmem %s919, %s984 [#allocation2]
                %s987 = scalar_lea.vmem %s930, %s985
              $region65: #{attenuation_fraction_sub.1} parent=59 // loop_footer
                %s943 = sadd.s32 %s941, 1
              $region66: #{attenuation_fraction_sub.1} parent=59 // loop_footer_branch
                %940 = sbr.rel target = $region62
              $region67: #{attenuation_fraction_sub.1} parent=59 // loop_exit
                _
              %s988 = sshrl.u32 %s926, 4
              %s989 = sand.u32 %s926, 15
              %s990 = smul.u32 %s988, 16
              %s991 = smul.u32 8, %s990
              %s992 = scalar_lea.vmem %s919, %s991 [#allocation2]
              %s993 = smul.u32 8, %s990
              %s994 = scalar_lea.vmem %s930, %s993
              // While loop
              $region68: #{attenuation_fraction_sub.1} parent=59 // loop_pre_header
                _
              $region69: #{attenuation_fraction_sub.1} parent=59 // loop_header
                %s996 = sphi 0, %s998
                %p997 = scmp.ge.s32.totalorder %s996, %s989
                %s1001 = sphi 0, %s1008
                %s1002 = sphi %s992, %s1011
                %s1003 = sphi %s994, %s1012
              $region70: #{attenuation_fraction_sub.1} parent=59 // loop_header_branch
                %1000 = sbr.rel (%p997) target = $region74
              $region71: #{attenuation_fraction_sub.1} parent=59 // loop_body
                %v1004 = vld [vmem:[%s1002] sm:$0xff]
                %1005 = vst [vmem:[%s1003] sm:$0xff] %v1004
                %s1006 = sadd.s32 1, %s1001
                %p1007 = scmp.ge.s32.totalorder %s1006, %s989
                %s1008 = scalar_select %p1007, 0, %s1006
                %s1009 = smul.u32 %s1008, 8
                %s1010 = smul.u32 %s1008, 8
                %s1011 = scalar_lea.vmem %s992, %s1009 [#allocation2]
                %s1012 = scalar_lea.vmem %s994, %s1010
              $region72: #{attenuation_fraction_sub.1} parent=59 // loop_footer
                %s998 = sadd.s32 %s996, 1
              $region73: #{attenuation_fraction_sub.1} parent=59 // loop_footer_branch
                %995 = sbr.rel target = $region69
              $region74: #{attenuation_fraction_sub.1} parent=59 // loop_exit
                _
            $region60: #{attenuation_fraction_sub.1} parent=51 // pred_fallthru
              _
          $region52: #{attenuation_fraction_sub.1} parent=47 // pred_fallthru
            _
          %1091 = vnop
        $region48: #{attenuation_fraction_sub.1} parent=43 // pred_fallthru
          _
      $region44: #{attenuation_fraction_sub.1} parent=5 // pred_fallthru
        _
      %p1092 = scmp.le.s32.totalorder 2, %s12
      // Predicated region
      $region97: #{attenuation_fraction_sub.1} parent=5 // pred_check
        %p1093 = pneg %p1092
      $region98: #{attenuation_fraction_sub.1} parent=5 // pred_check_branch
        %1095 = sbr.rel (%p1093) target = $region100
      $region99: #{attenuation_fraction_sub.1} parent=5 // pred_region
        %s1096 = ssub.s32 %s12, 2
        // Predicated region
        $region101: #{attenuation_fraction_sub.1} parent=99 // pred_check
          %p1097 = pneg %p177
        $region102: #{attenuation_fraction_sub.1} parent=99 // pred_check_branch
          %1099 = sbr.rel (%p1097) target = $region104
        $region103: #{attenuation_fraction_sub.1} parent=99 // pred_region
          %s1100 = sand.u32 %s162, 1
          %s1101 = sand.u32 %s162, 1
          %s1102 = smul.addr %s1101, 128
          %s1103 = scalar_lea.vmem [#allocation2], %s1102
        $region104: #{attenuation_fraction_sub.1} parent=99 // pred_fallthru
          _
      $region100: #{attenuation_fraction_sub.1} parent=5 // pred_fallthru
        _
    $region6: #{attenuation_fraction_sub.1} parent=1 // loop_footer
      %s16 = sadd.s32 1, %s12
    $region7: #{attenuation_fraction_sub.1} parent=1 // loop_footer_branch
      %11 = sbr.rel target = $region3
    $region8: #{attenuation_fraction_sub.1} parent=1 // loop_exit
      _

</llo_original>
